<compile_context>
chip_gen: v7x
topology: tpu7x:2x2x1
jax: 0.10.0
libtpu: 0.0.40
codegen_flags: <defaults>
</compile_context>

<pallas_src>
import functools

import jax
import jax.numpy as jnp
from jax.experimental import pallas as pl
from jax.experimental.pallas import tpu as pltpu


def _round_up(n, m):
    return ((n + m - 1) // m) * m


def _actor_critic_kernel(x_ref, w1_ref, b1_ref, wh_ref, bh_ref, out_ref,
                         *, compute_dtype):
    # x_ref:  (TB, D_in)        current batch tile
    # w1_ref: (D_in, H)         fc1 weight (VMEM-resident across all grid steps)
    # b1_ref: (1, H)            fc1 bias
    # wh_ref: (H, HEAD_PAD)     fused [actor | critic | zero-pad] head weight
    # bh_ref: (1, HEAD_PAD)     fused head bias
    # out_ref:(TB, HEAD_PAD)    lane-dense fused head output
    x = x_ref[...].astype(compute_dtype)
    w1 = w1_ref[...].astype(compute_dtype)
    wh = wh_ref[...].astype(compute_dtype)

    # fc1 + ReLU (MXU matmul, f32 accumulation; bias/ReLU in f32)
    h = jnp.dot(x, w1, preferred_element_type=jnp.float32)
    h = jnp.maximum(h + b1_ref[...], 0.0)

    # fused actor+critic head: one MXU matmul, one unmasked 128-lane-wide store
    y = jnp.dot(h.astype(compute_dtype), wh, preferred_element_type=jnp.float32)
    out_ref[...] = (y + bh_ref[...]).astype(out_ref.dtype)


def actor_critic_forward(x, params, *, block_b=None, compute_dtype=jnp.float32):
    """x: (B, input_size) f32.  Returns (logits_actor (B, num_actions), value (B, 1))."""
    w1, b1, wa, ba, wc, bc = (params["w1"], params["b1"],
                              params["wa"], params["ba"],
                              params["wc"], params["bc"])
    B, D_in = x.shape
    H = w1.shape[1]                       # 128
    A = wa.shape[1]                       # num_actions
    n_head = A + 1                        # logits + value
    HEAD_PAD = max(128, _round_up(n_head, 128))   # lane-dense output width

    # Fuse actor + critic into one zero-padded head (host/XLA side, done once per call;
    # in a real RL loop these would be prepared once outside the step).
    w_head = jnp.zeros((H, HEAD_PAD), jnp.float32)
    w_head = w_head.at[:, :A].set(wa).at[:, A:A + 1].set(wc)
    b_head = jnp.zeros((1, HEAD_PAD), jnp.float32)
    b_head = b_head.at[0, :A].set(ba).at[0, A].set(bc[0])
    b1_2d = b1.reshape(1, H)

    # Batch tiling: block_b rows per grid step (multiple of 8), batch padded to fit.
    if block_b is None:
        block_b = min(_round_up(B, 8), 256)
    block_b = _round_up(block_b, 8)
    B_pad = _round_up(B, block_b)
    x_p = x if B_pad == B else jnp.pad(x, ((0, B_pad - B), (0, 0)))
    grid = (B_pad // block_b,)

    itemsize = 4
    cost = pl.CostEstimate(
        flops=2 * B_pad * (D_in * H + H * HEAD_PAD),
        transcendentals=0,
        bytes_accessed=itemsize * (x_p.size + w1.size + b1_2d.size
                                   + w_head.size + b_head.size + B_pad * HEAD_PAD),
    )

    out = pl.pallas_call(
        functools.partial(_actor_critic_kernel, compute_dtype=compute_dtype),
        out_shape=jax.ShapeDtypeStruct((B_pad, HEAD_PAD), jnp.float32),
        grid=grid,
        in_specs=[
            pl.BlockSpec((block_b, D_in), lambda i: (i, 0)),   # x: tiled over batch
            pl.BlockSpec((D_in, H), lambda i: (0, 0)),          # fc1 W: resident
            pl.BlockSpec((1, H), lambda i: (0, 0)),              # fc1 b: resident
            pl.BlockSpec((H, HEAD_PAD), lambda i: (0, 0)),       # fused head W: resident
            pl.BlockSpec((1, HEAD_PAD), lambda i: (0, 0)),       # fused head b: resident
        ],
        out_specs=pl.BlockSpec((block_b, HEAD_PAD), lambda i: (i, 0)),
        compiler_params=pltpu.CompilerParams(
            dimension_semantics=("parallel",),                   # shard batch over TCs (v7x)
        ),
        cost_estimate=cost,
    )(x_p, w1, b1_2d, w_head, b_head)

    # Slice logits / value apart (and drop batch padding) in the wrapper.
    logits = out[:B, :A]
    value = out[:B, A:A + 1]
    return logits, value


def init_params(key, input_size, num_actions, hidden=128):
    """Deterministic init mimicking PyTorch nn.Linear default U(-1/sqrt(fan_in), 1/sqrt(fan_in))."""
    ks = jax.random.split(key, 6)

    def linear(kw, kb, fan_in, fan_out):
        bound = 1.0 / jnp.sqrt(jnp.asarray(fan_in, jnp.float32))
        # stored transposed relative to PyTorch: (in, out) so kernel does x @ W
        w = jax.random.uniform(kw, (fan_in, fan_out), jnp.float32, -bound, bound)
        b = jax.random.uniform(kb, (fan_out,), jnp.float32, -bound, bound)
        return w, b

    w1, b1 = linear(ks[0], ks[1], input_size, hidden)
    wa, ba = linear(ks[2], ks[3], hidden, num_actions)
    wc, bc = linear(ks[4], ks[5], hidden, 1)
    return {"w1": w1, "b1": b1, "wa": wa, "ba": ba, "wc": wc, "bc": bc}


if __name__ == "__main__":
    key = jax.random.PRNGKey(0)
    k_in, k_par = jax.random.split(key)

    batch = 8
    input_size = 32
    num_actions = 4

    x = jax.random.normal(k_in, (batch, input_size), jnp.float32)
    params = init_params(k_par, input_size, num_actions)

    # Default compute_dtype=f32 matches PyTorch exactly; pass compute_dtype=jnp.bfloat16
    # on v6e/v7x for ~2x MXU throughput once compute-bound.
    logits, value = actor_critic_forward(x, params)
    jax.block_until_ready((logits, value))

    # Reference check in plain JAX (same math as the PyTorch forward).
    h_ref = jnp.maximum(x @ params["w1"] + params["b1"], 0.0)
    logits_ref = h_ref @ params["wa"] + params["ba"]
    value_ref = h_ref @ params["wc"] + params["bc"]
    assert logits.shape == (batch, num_actions) and value.shape == (batch, 1)
    assert jnp.allclose(logits, logits_ref, atol=1e-5, rtol=1e-5)
    assert jnp.allclose(value, value_ref, atol=1e-5, rtol=1e-5)

    print("KERNEL_OK")
</pallas_src>

<mosaic_0001>
module attributes {stable_mosaic.version = 11 : i64} {
  func.func @_actor_critic_kernel(%arg0: i32, %arg1: memref<8x32xf32, #tpu.memory_space<vmem>>, %arg2: memref<32x128xf32, #tpu.memory_space<vmem>>, %arg3: memref<1x128xf32, #tpu.memory_space<vmem>>, %arg4: memref<128x128xf32, #tpu.memory_space<vmem>>, %arg5: memref<1x128xf32, #tpu.memory_space<vmem>>, %arg6: memref<8x128xf32, #tpu.memory_space<vmem>>) attributes {dimension_semantics = [#tpu.dimension_semantics<parallel>], iteration_bounds = array<i64: 1>, scalar_prefetch = 0 : i64, scratch_operands = 0 : i64, tpu.core_type = #tpu.core_type<tc>, window_params = [{transform_indices = @transform_0, window_bounds = array<i64: 8, 32>}, {pipeline_mode = #tpu.pipeline_mode<synchronous>, transform_indices = @transform_1, window_bounds = array<i64: 32, 128>}, {pipeline_mode = #tpu.pipeline_mode<synchronous>, transform_indices = @transform_2, window_bounds = array<i64: 1, 128>}, {pipeline_mode = #tpu.pipeline_mode<synchronous>, transform_indices = @transform_3, window_bounds = array<i64: 128, 128>}, {pipeline_mode = #tpu.pipeline_mode<synchronous>, transform_indices = @transform_4, window_bounds = array<i64: 1, 128>}, {transform_indices = @transform_5, window_bounds = array<i64: 8, 128>}]} {
    %c0 = arith.constant 0 : index
    %c0_0 = arith.constant 0 : index
    %0 = vector.load %arg1[%c0, %c0_0] : memref<8x32xf32, #tpu.memory_space<vmem>>, vector<8x32xf32>
    %c0_1 = arith.constant 0 : index
    %c0_2 = arith.constant 0 : index
    %1 = vector.load %arg2[%c0_1, %c0_2] : memref<32x128xf32, #tpu.memory_space<vmem>>, vector<32x128xf32>
    %c0_3 = arith.constant 0 : index
    %c0_4 = arith.constant 0 : index
    %2 = vector.load %arg4[%c0_3, %c0_4] : memref<128x128xf32, #tpu.memory_space<vmem>>, vector<128x128xf32>
    %cst = arith.constant dense<0.000000e+00> : vector<8x128xf32>
    %3 = tpu.matmul %0, %1, %cst {dimension_numbers = #tpu.dot_dimension_numbers<[1], [0], [0], [1], [0, 0, 1, 1], [], []>} : vector<8x32xf32>, vector<32x128xf32>, vector<8x128xf32> -> vector<8x128xf32>
    %c0_5 = arith.constant 0 : index
    %c0_6 = arith.constant 0 : index
    %4 = vector.load %arg3[%c0_5, %c0_6] : memref<1x128xf32, #tpu.memory_space<vmem>>, vector<1x128xf32>
    %5 = vector.broadcast %4 : vector<1x128xf32> to vector<8x128xf32>
    %6 = arith.addf %3, %5 : vector<8x128xf32>
    %cst_7 = arith.constant 0.000000e+00 : f32
    %7 = vector.broadcast %cst_7 : f32 to vector<8x128xf32>
    %8 = arith.maximumf %6, %7 : vector<8x128xf32>
    %cst_8 = arith.constant dense<0.000000e+00> : vector<8x128xf32>
    %9 = tpu.matmul %8, %2, %cst_8 {dimension_numbers = #tpu.dot_dimension_numbers<[1], [0], [0], [1], [0, 0, 1, 1], [], []>} : vector<8x128xf32>, vector<128x128xf32>, vector<8x128xf32> -> vector<8x128xf32>
    %c0_9 = arith.constant 0 : index
    %c0_10 = arith.constant 0 : index
    %10 = vector.load %arg5[%c0_9, %c0_10] : memref<1x128xf32, #tpu.memory_space<vmem>>, vector<1x128xf32>
    %11 = vector.broadcast %10 : vector<1x128xf32> to vector<8x128xf32>
    %12 = arith.addf %9, %11 : vector<8x128xf32>
    %c0_11 = arith.constant 0 : index
    %c0_12 = arith.constant 0 : index
    %13 = vector.load %arg6[%c0_11, %c0_12] : memref<8x128xf32, #tpu.memory_space<vmem>>, vector<8x128xf32>
    tpu.vector_store %arg6[%c0_11, %c0_12], %12 {strides = array<i32>} : memref<8x128xf32, #tpu.memory_space<vmem>>, vector<8x128xf32>,
    return
  }
  func.func @transform_0(%arg0: i32) -> (i32, i32) {
    %c0_i32 = arith.constant 0 : i32
    %c0_i32_0 = arith.constant 0 : i32
    return %arg0, %c0_i32 : i32, i32
  }
  func.func @transform_1(%arg0: i32) -> (i32, i32) {
    %c0_i32 = arith.constant 0 : i32
    %c0_i32_0 = arith.constant 0 : i32
    %c0_i32_1 = arith.constant 0 : i32
    return %c0_i32, %c0_i32_0 : i32, i32
  }
  func.func @transform_2(%arg0: i32) -> (i32, i32) {
    %c0_i32 = arith.constant 0 : i32
    %c0_i32_0 = arith.constant 0 : i32
    %c0_i32_1 = arith.constant 0 : i32
    return %c0_i32, %c0_i32_0 : i32, i32
  }
  func.func @transform_3(%arg0: i32) -> (i32, i32) {
    %c0_i32 = arith.constant 0 : i32
    %c0_i32_0 = arith.constant 0 : i32
    %c0_i32_1 = arith.constant 0 : i32
    return %c0_i32, %c0_i32_0 : i32, i32
  }
  func.func @transform_4(%arg0: i32) -> (i32, i32) {
    %c0_i32 = arith.constant 0 : i32
    %c0_i32_0 = arith.constant 0 : i32
    %c0_i32_1 = arith.constant 0 : i32
    return %c0_i32, %c0_i32_0 : i32, i32
  }
  func.func @transform_5(%arg0: i32) -> (i32, i32) {
    %c0_i32 = arith.constant 0 : i32
    %c0_i32_0 = arith.constant 0 : i32
    return %arg0, %c0_i32 : i32, i32
  }
}

</mosaic_0001>

<llo_original>
// kernel: tpu_custom_call.1
$region0: #{tpu_custom_call.1}
  #allocation0 [shape = 'u32[]', space=smem, size = 0x4, offset = 0x4, fixed_abs, tag = 'smem constant byte address 0x4 - core index']
  #allocation1 [shape = 'u32[144,128]{1,0:T(1,128)}', space=vmem, size = 0x12000, scoped, tag = 'internal scratch']
  %s0 = inlined_call_operand.hbm [shape: f32[8,32], index: 0, kind: input, shape index: {}]
  %s1 = inlined_call_operand.hbm [shape: f32[32,128], index: 1, kind: input, shape index: {}]
  %s2 = inlined_call_operand.vmem [shape: f32[1,128], index: 2, kind: input, shape index: {}]
  %s3 = inlined_call_operand.hbm [shape: f32[128,128], index: 3, kind: input, shape index: {}]
  %s4 = inlined_call_operand.vmem [shape: f32[1,128], index: 4, kind: input, shape index: {}]
  %s5 = inlined_call_operand.hbm [shape: f32[8,128], index: 5, kind: output, shape index: {}]
  %s6 = sld [smem:[#allocation0]]
  $region42: #{tpu_custom_call.1} parent=0
    _
  %s8 = ssub.s32 1, %s6
  %s9 = scalar_select 0, %s8, %s6
  $region1: #{tpu_custom_call.1} parent=0
    #allocation2 [shape = 'u8[4096]{0}', space=vmem, size = 0x1000, scoped, tag = 'input window, operand 0, single buffered']
    #allocation3 [shape = 's32[1]{0}', space=sflag, size = 0x4, scoped, tag = 'scoped memory for tpu_custom_call.1']
    #allocation4 [shape = 's32[1]{0}', space=sflag, size = 0x4, scoped, tag = 'scoped memory for tpu_custom_call.1']
    #allocation5 [shape = 'u8[16384]{0}', space=vmem, size = 0x4000, scoped, tag = 'input window, operand 1, single buffered']
    #allocation6 [shape = 's32[1]{0}', space=sflag, size = 0x4, scoped, tag = 'scoped memory for tpu_custom_call.1']
    #allocation7 [shape = 'u8[65536]{0}', space=vmem, size = 0x10000, scoped, tag = 'input window, operand 3, single buffered']
    #allocation8 [shape = 'u8[4096]{0}', space=vmem, size = 0x1000, scoped, tag = 'output window, operand 0, single buffered']
    %10 = vsyncpa [#allocation3], 0
    %11 = vsyncpa [#allocation6], 0
    %12 = vsyncpa [#allocation4], 0
    // Predicated region
    $region2: #{tpu_custom_call.1} parent=1 // pred_check
      _
    $region3: #{tpu_custom_call.1} parent=1 // pred_check_branch
      %14 = sbr.rel (0) target = $region5
    $region4: #{tpu_custom_call.1} parent=1 // pred_region
      %s16 = ssub.s32 128, 128
      %17 = vsyncadd [#allocation3], %s16
      %s19 = sshll.u32 [#allocation2], 4
      %s20 = int_to_ptr.vmem [resolvable:$true] %s19
      %22 = dma.hbm_to_vmem [thread:$0]  %s0, 128, %s20, [#allocation3]
    $region5: #{tpu_custom_call.1} parent=1 // pred_fallthru
      _
    // Predicated region
    $region6: #{tpu_custom_call.1} parent=1 // pred_check
      _
    $region7: #{tpu_custom_call.1} parent=1 // pred_check_branch
      %24 = sbr.rel (0) target = $region9
    $region8: #{tpu_custom_call.1} parent=1 // pred_region
      %s26 = ssub.s32 512, 512
      %27 = vsyncadd [#allocation6], %s26
      %s28 = sshll.u32 [#allocation5], 4
      %s29 = int_to_ptr.vmem [resolvable:$true] %s28
      %34 = dma.hbm_to_vmem [thread:$0]  %s1, 512, %s29, [#allocation6], 128, 128, 8
    $region9: #{tpu_custom_call.1} parent=1 // pred_fallthru
      _
    // Predicated region
    $region10: #{tpu_custom_call.1} parent=1 // pred_check
      _
    $region11: #{tpu_custom_call.1} parent=1 // pred_check_branch
      %36 = sbr.rel (0) target = $region13
    $region12: #{tpu_custom_call.1} parent=1 // pred_region
      _
    $region13: #{tpu_custom_call.1} parent=1 // pred_fallthru
      _
    // Predicated region
    $region14: #{tpu_custom_call.1} parent=1 // pred_check
      _
    $region15: #{tpu_custom_call.1} parent=1 // pred_check_branch
      %38 = sbr.rel (0) target = $region17
    $region16: #{tpu_custom_call.1} parent=1 // pred_region
      %s40 = ssub.s32 2048, 2048
      %41 = vsyncadd [#allocation6], %s40
      %s42 = sshll.u32 [#allocation7], 4
      %s43 = int_to_ptr.vmem [resolvable:$true] %s42
      %48 = dma.hbm_to_vmem [thread:$0]  %s3, 2048, %s43, [#allocation6], 128, 128, 8
    $region17: #{tpu_custom_call.1} parent=1 // pred_fallthru
      _
    // Predicated region
    $region18: #{tpu_custom_call.1} parent=1 // pred_check
      _
    $region19: #{tpu_custom_call.1} parent=1 // pred_check_branch
      %50 = sbr.rel (0) target = $region21
    $region20: #{tpu_custom_call.1} parent=1 // pred_region
      _
    $region21: #{tpu_custom_call.1} parent=1 // pred_fallthru
      _
    // Predicated region
    $region22: #{tpu_custom_call.1} parent=1 // pred_check
      _
    $region23: #{tpu_custom_call.1} parent=1 // pred_check_branch
      %52 = sbr.rel (0) target = $region25
    $region24: #{tpu_custom_call.1} parent=1 // pred_region
      %53 = dma.done [#allocation3], 128
    $region25: #{tpu_custom_call.1} parent=1 // pred_fallthru
      _
    // Predicated region
    $region26: #{tpu_custom_call.1} parent=1 // pred_check
      _
    $region27: #{tpu_custom_call.1} parent=1 // pred_check_branch
      %55 = sbr.rel (0) target = $region29
    $region28: #{tpu_custom_call.1} parent=1 // pred_region
      %56 = dma.done [#allocation6], 512
    $region29: #{tpu_custom_call.1} parent=1 // pred_fallthru
      _
    // Predicated region
    $region30: #{tpu_custom_call.1} parent=1 // pred_check
      _
    $region31: #{tpu_custom_call.1} parent=1 // pred_check_branch
      %58 = sbr.rel (0) target = $region33
    $region32: #{tpu_custom_call.1} parent=1 // pred_region
      %59 = dma.done [#allocation6], 2048
    $region33: #{tpu_custom_call.1} parent=1 // pred_fallthru
      _
    %v60 = vld [vmem:[#allocation2] sm:$0xff]
    %v61 = vld [vmem:[#allocation5] sm:$0xff]
    %v62 = vld [vmem:[#allocation5 + $0x8] sm:$0xff]
    %v63 = vld [vmem:[#allocation5 + $0x10] sm:$0xff]
    %v64 = vld [vmem:[#allocation5 + $0x18] sm:$0xff]
    %v65 = vld [vmem:[#allocation7] sm:$0xff]
    %v66 = vld [vmem:[#allocation7 + $0x8] sm:$0xff]
    %v67 = vld [vmem:[#allocation7 + $0x10] sm:$0xff]
    %v68 = vld [vmem:[#allocation7 + $0x18] sm:$0xff]
    %v69 = vld [vmem:[#allocation7 + $0x20] sm:$0xff]
    %v70 = vld [vmem:[#allocation7 + $0x28] sm:$0xff]
    %v71 = vld [vmem:[#allocation7 + $0x30] sm:$0xff]
    %v72 = vld [vmem:[#allocation7 + $0x38] sm:$0xff]
    %v73 = vld [vmem:[#allocation7 + $0x40] sm:$0xff]
    %v74 = vld [vmem:[#allocation7 + $0x48] sm:$0xff]
    %v75 = vld [vmem:[#allocation7 + $0x50] sm:$0xff]
    %v76 = vld [vmem:[#allocation7 + $0x58] sm:$0xff]
    %v77 = vld [vmem:[#allocation7 + $0x60] sm:$0xff]
    %v78 = vld [vmem:[#allocation7 + $0x68] sm:$0xff]
    %v79 = vld [vmem:[#allocation7 + $0x70] sm:$0xff]
    %v80 = vld [vmem:[#allocation7 + $0x78] sm:$0xff]
    %v81 = vld [vmem:[%s2] sm:$0x1]
    %v83 = vlaneseq
    %v84 = vshrl.u32 %v83, 7
    %v85 = vsub.s32 0, %v84
    %v86 = vrot.slane %v81, %v85
    %vm88 = vcmask 261120
    %v90 = vsel %vm88, %v60, 0
    %92 = vmatprep.subr.mxu0 0.0
    %93 = vmatpush1.msra.mxu0 %v61
    %94 = vmatprep.subr.mxu0 0.0
    %95 = vmatpush1.msra.mxu0 %v62
    %96 = vmatprep.subr.mxu0 0.0
    %97 = vmatpush1.msra.mxu0 %v63
    %98 = vmatprep.subr.mxu0 0.0
    %99 = vmatpush1.msra.mxu0 %v64
    %100 = vmatprep.subr.mxu0 0.0
    %101 = vmatpush1.msra.mxu0 0.0
    %102 = vmatprep.subr.mxu0 0.0
    %103 = vmatpush1.msra.mxu0 0.0
    %104 = vmatprep.subr.mxu0 0.0
    %105 = vmatpush1.msra.mxu0 0.0
    %106 = vmatprep.subr.mxu0 0.0
    %107 = vmatpush1.msra.mxu0 0.0
    %108 = vmatprep.subr.mxu0 0.0
    %109 = vmatpush1.msra.mxu0 0.0
    %110 = vmatprep.subr.mxu0 0.0
    %111 = vmatpush1.msra.mxu0 0.0
    %112 = vmatprep.subr.mxu0 0.0
    %113 = vmatpush1.msra.mxu0 0.0
    %114 = vmatprep.subr.mxu0 0.0
    %115 = vmatpush1.msra.mxu0 0.0
    %116 = vmatprep.subr.mxu0 0.0
    %117 = vmatpush1.msra.mxu0 0.0
    %118 = vmatprep.subr.mxu0 0.0
    %119 = vmatpush1.msra.mxu0 0.0
    %120 = vmatprep.subr.mxu0 0.0
    %121 = vmatpush1.msra.mxu0 0.0
    %122 = vmatprep.subr.mxu0 0.0
    %123 = vmatpush1.msra.mxu0 0.0
    %124 = vmatprep.subr.mxu0 0.0
    %125 = vmatpush1.msra.mxu0 0.0
    %126 = vmatprep.subr.mxu0 0.0
    %127 = vmatpush1.msra.mxu0 0.0
    %128 = vmatprep.subr.mxu0 0.0
    %129 = vmatpush1.msra.mxu0 0.0
    %130 = vmatprep.subr.mxu0 0.0
    %131 = vmatpush1.msra.mxu0 0.0
    %132 = vmatprep.subr.mxu0 0.0
    %133 = vmatpush1.msra.mxu0 0.0
    %134 = vmatprep.subr.mxu0 0.0
    %135 = vmatpush1.msra.mxu0 0.0
    %136 = vmatprep.subr.mxu0 0.0
    %137 = vmatpush1.msra.mxu0 0.0
    %138 = vmatprep.subr.mxu0 0.0
    %139 = vmatpush1.msra.mxu0 0.0
    %140 = vmatprep.subr.mxu0 0.0
    %141 = vmatpush1.msra.mxu0 0.0
    %142 = vmatprep.subr.mxu0 0.0
    %143 = vmatpush1.msra.mxu0 0.0
    %144 = vmatprep.subr.mxu0 0.0
    %145 = vmatpush1.msra.mxu0 0.0
    %146 = vmatprep.subr.mxu0 0.0
    %147 = vmatpush1.msra.mxu0 0.0
    %148 = vmatprep.subr.mxu0 0.0
    %149 = vmatpush1.msra.mxu0 0.0
    %150 = vmatprep.subr.mxu0 0.0
    %151 = vmatpush1.msra.mxu0 0.0
    %152 = vmatprep.subr.mxu0 0.0
    %153 = vmatpush1.msra.mxu0 0.0
    %154 = vmatprep.subr.mxu0 0.0
    %155 = vmatpush1.msra.mxu0 0.0
    %156 = vmatprep.mubr.f32.mxu0 0.0
    %157 = vmatmul.mubr.f32.gmra.mrb[0].mxu0 %v90
    %v158 = vpop.f32.mrb[0].mxu0
    %v159 = vadd.f32 %v86, %v158
    %v160 = vpop.f32.mrb[0].mxu0
    %161 = vdwg.mxu0
    %v162 = vmax.f32 %v159, 0.0
    %v163 = vld [vmem:[%s4] sm:$0x1]
    %v165 = vlaneseq
    %v166 = vshrl.u32 %v165, 7
    %v167 = vsub.s32 0, %v166
    %v168 = vrot.slane %v163, %v167
    %170 = vmatprep.subr.mxu0 0.0
    %171 = vmatpush1.msra.mxu0 %v65
    %172 = vmatprep.subr.mxu0 0.0
    %173 = vmatpush1.msra.mxu0 %v66
    %174 = vmatprep.subr.mxu0 0.0
    %175 = vmatpush1.msra.mxu0 %v67
    %176 = vmatprep.subr.mxu0 0.0
    %177 = vmatpush1.msra.mxu0 %v68
    %178 = vmatprep.subr.mxu0 0.0
    %179 = vmatpush1.msra.mxu0 %v69
    %180 = vmatprep.subr.mxu0 0.0
    %181 = vmatpush1.msra.mxu0 %v70
    %182 = vmatprep.subr.mxu0 0.0
    %183 = vmatpush1.msra.mxu0 %v71
    %184 = vmatprep.subr.mxu0 0.0
    %185 = vmatpush1.msra.mxu0 %v72
    %186 = vmatprep.subr.mxu0 0.0
    %187 = vmatpush1.msra.mxu0 %v73
    %188 = vmatprep.subr.mxu0 0.0
    %189 = vmatpush1.msra.mxu0 %v74
    %190 = vmatprep.subr.mxu0 0.0
    %191 = vmatpush1.msra.mxu0 %v75
    %192 = vmatprep.subr.mxu0 0.0
    %193 = vmatpush1.msra.mxu0 %v76
    %194 = vmatprep.subr.mxu0 0.0
    %195 = vmatpush1.msra.mxu0 %v77
    %196 = vmatprep.subr.mxu0 0.0
    %197 = vmatpush1.msra.mxu0 %v78
    %198 = vmatprep.subr.mxu0 0.0
    %199 = vmatpush1.msra.mxu0 %v79
    %200 = vmatprep.subr.mxu0 0.0
    %201 = vmatpush1.msra.mxu0 %v80
    %202 = vmatprep.subr.mxu0 0.0
    %203 = vmatpush1.msra.mxu0 0.0
    %204 = vmatprep.subr.mxu0 0.0
    %205 = vmatpush1.msra.mxu0 0.0
    %206 = vmatprep.subr.mxu0 0.0
    %207 = vmatpush1.msra.mxu0 0.0
    %208 = vmatprep.subr.mxu0 0.0
    %209 = vmatpush1.msra.mxu0 0.0
    %210 = vmatprep.subr.mxu0 0.0
    %211 = vmatpush1.msra.mxu0 0.0
    %212 = vmatprep.subr.mxu0 0.0
    %213 = vmatpush1.msra.mxu0 0.0
    %214 = vmatprep.subr.mxu0 0.0
    %215 = vmatpush1.msra.mxu0 0.0
    %216 = vmatprep.subr.mxu0 0.0
    %217 = vmatpush1.msra.mxu0 0.0
    %218 = vmatprep.subr.mxu0 0.0
    %219 = vmatpush1.msra.mxu0 0.0
    %220 = vmatprep.subr.mxu0 0.0
    %221 = vmatpush1.msra.mxu0 0.0
    %222 = vmatprep.subr.mxu0 0.0
    %223 = vmatpush1.msra.mxu0 0.0
    %224 = vmatprep.subr.mxu0 0.0
    %225 = vmatpush1.msra.mxu0 0.0
    %226 = vmatprep.subr.mxu0 0.0
    %227 = vmatpush1.msra.mxu0 0.0
    %228 = vmatprep.subr.mxu0 0.0
    %229 = vmatpush1.msra.mxu0 0.0
    %230 = vmatprep.subr.mxu0 0.0
    %231 = vmatpush1.msra.mxu0 0.0
    %232 = vmatprep.subr.mxu0 0.0
    %233 = vmatpush1.msra.mxu0 0.0
    %234 = vmatprep.mubr.f32.mxu0 0.0
    %235 = vmatmul.mubr.f32.gmra.mrb[0].mxu0 %v162
    %v236 = vpop.f32.mrb[0].mxu0
    %v237 = vadd.f32 %v168, %v236
    %v238 = vpop.f32.mrb[0].mxu0
    %239 = vdwg.mxu0
    %240 = vst [vmem:[#allocation8] sm:$0xff] %v237
    // Predicated region
    $region34: #{tpu_custom_call.1} parent=1 // pred_check
      _
    $region35: #{tpu_custom_call.1} parent=1 // pred_check_branch
      %242 = sbr.rel (0) target = $region37
    $region36: #{tpu_custom_call.1} parent=1 // pred_region
      %s244 = ssub.s32 128, 128
      %245 = vsyncadd [#allocation4], %s244
      %s247 = sshll.u32 [#allocation8], 4
      %s248 = int_to_ptr.vmem [resolvable:$true] %s247
      %250 = dma.vmem_to_hbm [thread:$0]  %s248, 128, %s5, [#allocation4]
    $region37: #{tpu_custom_call.1} parent=1 // pred_fallthru
      _
    // Predicated region
    $region38: #{tpu_custom_call.1} parent=1 // pred_check
      _
    $region39: #{tpu_custom_call.1} parent=1 // pred_check_branch
      %252 = sbr.rel (0) target = $region41
    $region40: #{tpu_custom_call.1} parent=1 // pred_region
      %253 = dma.done [#allocation4], 128
    $region41: #{tpu_custom_call.1} parent=1 // pred_fallthru
      _
    %254 = vsyncpa [#allocation3], 1
    %255 = vsyncpa [#allocation6], 1
    %256 = vsyncpa [#allocation4], 1

</llo_original>
